<compile_context>
chip_gen: v7x
topology: tpu7x:2x2x1
jax: 0.10.0
libtpu: 0.0.40
codegen_flags: <defaults>
</compile_context>

<pallas_src>
import jax
import jax.numpy as jnp
from jax.experimental import pallas as pl
from jax.experimental.pallas import tpu as pltpu

K = 3  # conv1d kernel size (same padding)


# ---------------------------------------------------------------------------
# Fused kernel: conv1d + ReLU + masked mean pool + pairwise L2 distance.
# Single invocation (no grid) — the whole problem (~200 KiB) fits VMEM on
# every TPU generation.
# ---------------------------------------------------------------------------
def anchor_kernel(len_ref, x_ref, w_ref, b_ref, dist_ref):
    # len_ref:  (B, 1)          f32 valid length per sequence
    # x_ref:    (B*L, D_in)     flattened batch, channel-last
    # w_ref:    (K*D_in, H)     conv taps flattened tap-major (matches concat)
    # b_ref:    (1, H)          conv bias
    # dist_ref: (B, B)          pairwise L2 distances
    BL, D_in = x_ref.shape
    B = len_ref.shape[0]
    L = BL // B

    x = x_ref[...]                                              # (BL, D_in)

    # --- conv1d (k=3, same padding, per-sequence) as ONE im2col MXU matmul ---
    # Previous/next rows come from sublane rolls of the flattened batch; rows
    # that would cross a sequence boundary are zeroed (== the conv's zero
    # padding). Boundary masks are narrow (BL, 1) columns -> broadcast over
    # lanes inside jnp.where (keeps vreg pressure low).
    pos = jax.lax.broadcasted_iota(jnp.int32, (BL, 1), 0)       # flat row idx
    r = pos % L                                                 # 1-vreg int op
    is_first = r == 0                                           # (BL, 1) bool
    is_last = r == (L - 1)                                      # (BL, 1) bool

    x_prev = jnp.where(is_first, 0.0, pltpu.roll(x, shift=1, axis=0))
    x_next = jnp.where(is_last, 0.0, pltpu.roll(x, shift=BL - 1, axis=0))

    # im2col operand: lane-axis concat -> (BL, 3*D_in); single K=3*D_in dot.
    # TODO(synk): at production sizes cast x_cat / w to bf16 (keep f32 acc).
    x_cat = jnp.concatenate([x_prev, x, x_next], axis=1)        # (BL, 3*D_in)
    acc = jnp.dot(x_cat, w_ref[...], preferred_element_type=jnp.float32)
    h = jnp.maximum(acc + b_ref[...], 0.0)                      # (BL, H) ReLU

    # --- masked mean pool as an MXU matmul: emb = P @ h ---
    lens = len_ref[...]                                         # (B, 1) f32
    inv_len = 1.0 / jnp.maximum(lens, 1.0)                      # exact (8 vals)
    col = jax.lax.broadcasted_iota(jnp.int32, (B, BL), 1)
    row = jax.lax.broadcasted_iota(jnp.int32, (B, BL), 0)
    t = col - row * L                                           # no div/mod
    valid = (t >= 0) & (t.astype(jnp.float32) < lens)           # (B, BL)
    pool = jnp.where(valid, inv_len, 0.0)                       # (B, BL)
    emb = jnp.dot(pool, h, preferred_element_type=jnp.float32)  # (B, H)

    # --- pairwise L2 via Gram trick (all on MXU, no (B,B,H) intermediate) ---
    gram = jax.lax.dot_general(emb, emb, (((1,), (1,)), ((), ())),
                               preferred_element_type=jnp.float32)  # (B, B)
    sq = jnp.sum(emb * emb, axis=1, keepdims=True)              # (B, 1) ||e||^2
    d2 = jnp.maximum(sq + sq.T - 2.0 * gram, 0.0)               # clamp fp noise
    eye = (jax.lax.broadcasted_iota(jnp.int32, (B, B), 0) ==
           jax.lax.broadcasted_iota(jnp.int32, (B, B), 1))
    dist_ref[...] = jnp.sqrt(jnp.where(eye, 0.0, d2))           # exact-0 diag


# ---------------------------------------------------------------------------
# Wrapper — keeps the AnchorModel.forward(inputs, masks) interface.
# TODO(synk): for many independent (x, mask) problems, add a leading grid
# axis with dimension_semantics=("parallel",) to amortize launch cost and use
# both v7x TensorCores; a single problem is latency-bound either way.
# ---------------------------------------------------------------------------
def anchor_model_forward(x, mask, w, b):
    """x: (B, L, D_in) f32, mask: (B, L) f32 prefix mask, w: (K, D_in, H), b: (1, H)."""
    B, L, D_in = x.shape
    H = w.shape[-1]
    # NOTE: assumes prefix (length-style) masks, as in the protein pipeline;
    # lengths are derived in the wrapper and the mask is rebuilt in-kernel.
    lens = jnp.sum(mask, axis=1, keepdims=True)                 # (B, 1) f32
    x2d = x.reshape(B * L, D_in)                                # free reshape
    w_flat = w.reshape(K * D_in, H)                             # tap-major rows

    return pl.pallas_call(
        anchor_kernel,
        out_shape=jax.ShapeDtypeStruct((B, B), jnp.float32),
        in_specs=[
            pl.BlockSpec((B, 1), lambda: (0, 0)),               # lengths
            pl.BlockSpec((B * L, D_in), lambda: (0, 0)),        # x, flattened
            pl.BlockSpec((K * D_in, H), lambda: (0, 0)),        # im2col weights
            pl.BlockSpec((1, H), lambda: (0, 0)),               # conv bias
        ],
        out_specs=pl.BlockSpec((B, B), lambda: (0, 0)),
    )(lens, x2d, w_flat, b)


# ---------------------------------------------------------------------------
# Pure-JAX reference for a sanity check
# ---------------------------------------------------------------------------
def reference_forward(x, mask, w, b):
    B, L, D_in = x.shape
    pad = K // 2
    x_pad = jnp.pad(x, ((0, 0), (pad, pad), (0, 0)))
    conv = sum(jnp.einsum("bld,dh->blh", x_pad[:, k:k + L, :], w[k])
               for k in range(K)) + b[None, :, :]
    h = jax.nn.relu(conv)
    m = mask[:, :, None]
    emb = jnp.sum(h * m, axis=1) / jnp.maximum(jnp.sum(m, axis=1), 1.0)
    diff = emb[:, None, :] - emb[None, :, :]
    return jnp.sqrt(jnp.sum(diff * diff, axis=-1))


if __name__ == "__main__":
    B, L, D_in, H = 8, 16, 32, 128

    key = jax.random.PRNGKey(0)
    k_x, k_w, k_b = jax.random.split(key, 3)

    x = jax.random.normal(k_x, (B, L, D_in), dtype=jnp.float32)

    # deterministic variable-length (prefix) masks
    lengths = jnp.array([16, 12, 8, 16, 10, 14, 6, 16], dtype=jnp.int32)
    mask = (jnp.arange(L)[None, :] < lengths[:, None]).astype(jnp.float32)

    # deterministic parameter init (Conv1d(D_in -> H, kernel=3) shapes)
    w = 0.05 * jax.random.normal(k_w, (K, D_in, H), dtype=jnp.float32)
    b = 0.01 * jax.random.normal(k_b, (1, H), dtype=jnp.float32)

    out = jax.block_until_ready(anchor_model_forward(x, mask, w, b))
    ref = reference_forward(x, mask, w, b)

    assert out.shape == (B, B)
    assert jnp.allclose(out, ref, rtol=1e-3, atol=1e-3), "mismatch vs reference"
    print("KERNEL_OK")
</pallas_src>

<mosaic_0001>
module attributes {stable_mosaic.version = 11 : i64} {
  func.func @anchor_kernel(%arg0: memref<8x1xf32, #tpu.memory_space<vmem>>, %arg1: memref<128x32xf32, #tpu.memory_space<vmem>>, %arg2: memref<96x128xf32, #tpu.memory_space<vmem>>, %arg3: memref<1x128xf32, #tpu.memory_space<vmem>>, %arg4: memref<8x8xf32, #tpu.memory_space<vmem>>) attributes {dimension_semantics = [], scalar_prefetch = 0 : i64, scratch_operands = 0 : i64, tpu.core_type = #tpu.core_type<tc>} {
    %c0 = arith.constant 0 : index
    %c0_0 = arith.constant 0 : index
    %0 = vector.load %arg1[%c0, %c0_0] : memref<128x32xf32, #tpu.memory_space<vmem>>, vector<128x32xf32>
    %1 = tpu.iota {dimensions = array<i32: 0>} : vector<128x1xi32>
    %c16_i32 = arith.constant 16 : i32
    %c0_i32 = arith.constant 0 : i32
    %2 = arith.cmpi eq, %c16_i32, %c0_i32 : i32
    %c1_i32 = arith.constant 1 : i32
    %3 = arith.select %2, %c1_i32, %c16_i32 : i32
    %4 = vector.broadcast %3 : i32 to vector<128x1xi32>
    %5 = arith.remsi %1, %4 : vector<128x1xi32>
    %c0_i32_1 = arith.constant 0 : i32
    %6 = vector.broadcast %c0_i32_1 : i32 to vector<128x1xi32>
    %7 = arith.cmpi ne, %5, %6 : vector<128x1xi32>
    %c0_i32_2 = arith.constant 0 : i32
    %8 = vector.broadcast %c0_i32_2 : i32 to vector<128x1xi32>
    %9 = arith.cmpi slt, %5, %8 : vector<128x1xi32>
    %c0_i32_3 = arith.constant 0 : i32
    %10 = arith.cmpi slt, %3, %c0_i32_3 : i32
    %11 = vector.broadcast %10 : i1 to vector<128x1xi1>
    %12 = vector.broadcast %11 : vector<128x1xi1> to vector<128x1xi1>
    %13 = arith.xori %9, %12 : vector<128x1xi1>
    %14 = arith.andi %13, %7 : vector<128x1xi1>
    %15 = vector.broadcast %3 : i32 to vector<128x1xi32>
    %16 = arith.addi %5, %15 : vector<128x1xi32>
    %17 = arith.select %14, %16, %5 : vector<128x1xi1>, vector<128x1xi32>
    %c0_i32_4 = arith.constant 0 : i32
    %18 = vector.broadcast %c0_i32_4 : i32 to vector<128x1xi32>
    %19 = arith.cmpi eq, %17, %18 : vector<128x1xi32>
    %c15_i32 = arith.constant 15 : i32
    %20 = vector.broadcast %c15_i32 : i32 to vector<128x1xi32>
    %21 = arith.cmpi eq, %17, %20 : vector<128x1xi32>
    %c1_i32_5 = arith.constant 1 : i32
    %22 = tpu.dynamic_rotate %0 by %c1_i32_5 dim 0 : vector<128x32xf32>, i32 -> vector<128x32xf32>
    %cst = arith.constant 0.000000e+00 : f32
    %23 = vector.shape_cast %19 : vector<128x1xi1> to vector<128x1xi1>
    %24 = vector.broadcast %23 : vector<128x1xi1> to vector<128x32xi1>
    %25 = vector.broadcast %cst : f32 to vector<128x32xf32>
    %26 = arith.select %24, %25, %22 : vector<128x32xi1>, vector<128x32xf32>
    %c127_i32 = arith.constant 127 : i32
    %27 = tpu.dynamic_rotate %0 by %c127_i32 dim 0 : vector<128x32xf32>, i32 -> vector<128x32xf32>
    %cst_6 = arith.constant 0.000000e+00 : f32
    %28 = vector.shape_cast %21 : vector<128x1xi1> to vector<128x1xi1>
    %29 = vector.broadcast %28 : vector<128x1xi1> to vector<128x32xi1>
    %30 = vector.broadcast %cst_6 : f32 to vector<128x32xf32>
    %31 = arith.select %29, %30, %27 : vector<128x32xi1>, vector<128x32xf32>
    %32 = tpu.concatenate %26, %0, %31 in 1 : vector<128x32xf32>, vector<128x32xf32>, vector<128x32xf32> -> vector<128x96xf32>
    %c0_7 = arith.constant 0 : index
    %c0_8 = arith.constant 0 : index
    %33 = vector.load %arg2[%c0_7, %c0_8] : memref<96x128xf32, #tpu.memory_space<vmem>>, vector<96x128xf32>
    %cst_9 = arith.constant dense<0.000000e+00> : vector<128x128xf32>
    %34 = tpu.matmul %32, %33, %cst_9 {dimension_numbers = #tpu.dot_dimension_numbers<[1], [0], [0], [1], [0, 0, 1, 1], [], []>} : vector<128x96xf32>, vector<96x128xf32>, vector<128x128xf32> -> vector<128x128xf32>
    %c0_10 = arith.constant 0 : index
    %c0_11 = arith.constant 0 : index
    %35 = vector.load %arg3[%c0_10, %c0_11] : memref<1x128xf32, #tpu.memory_space<vmem>>, vector<1x128xf32>
    %36 = vector.broadcast %35 : vector<1x128xf32> to vector<128x128xf32>
    %37 = arith.addf %34, %36 : vector<128x128xf32>
    %cst_12 = arith.constant 0.000000e+00 : f32
    %38 = vector.broadcast %cst_12 : f32 to vector<128x128xf32>
    %39 = arith.maximumf %37, %38 : vector<128x128xf32>
    %c0_13 = arith.constant 0 : index
    %c0_14 = arith.constant 0 : index
    %40 = vector.load %arg0[%c0_13, %c0_14] : memref<8x1xf32, #tpu.memory_space<vmem>>, vector<8x1xf32>
    %cst_15 = arith.constant 1.000000e+00 : f32
    %41 = vector.broadcast %cst_15 : f32 to vector<8x1xf32>
    %42 = arith.maximumf %40, %41 : vector<8x1xf32>
    %cst_16 = arith.constant 1.000000e+00 : f32
    %43 = vector.broadcast %cst_16 : f32 to vector<8x1xf32>
    %44 = arith.divf %43, %42 : vector<8x1xf32>
    %45 = tpu.iota {dimensions = array<i32: 1>} : vector<8x128xi32>
    %46 = tpu.iota {dimensions = array<i32: 0>} : vector<8x128xi32>
    %c16_i32_17 = arith.constant 16 : i32
    %47 = vector.broadcast %c16_i32_17 : i32 to vector<8x128xi32>
    %48 = arith.muli %46, %47 : vector<8x128xi32>
    %49 = arith.subi %45, %48 : vector<8x128xi32>
    %c0_i32_18 = arith.constant 0 : i32
    %50 = vector.broadcast %c0_i32_18 : i32 to vector<8x128xi32>
    %51 = arith.cmpi sge, %49, %50 : vector<8x128xi32>
    %52 = arith.sitofp %49 : vector<8x128xi32> to vector<8x128xf32>
    %53 = vector.broadcast %40 : vector<8x1xf32> to vector<8x128xf32>
    %54 = arith.cmpf olt, %52, %53 : vector<8x128xf32>
    %55 = arith.andi %51, %54 : vector<8x128xi1>
    %cst_19 = arith.constant 0.000000e+00 : f32
    %56 = vector.shape_cast %44 : vector<8x1xf32> to vector<8x1xf32>
    %57 = vector.broadcast %56 : vector<8x1xf32> to vector<8x128xf32>
    %58 = vector.broadcast %cst_19 : f32 to vector<8x128xf32>
    %59 = arith.select %55, %57, %58 : vector<8x128xi1>, vector<8x128xf32>
    %cst_20 = arith.constant dense<0.000000e+00> : vector<8x128xf32>
    %60 = tpu.matmul %59, %39, %cst_20 {dimension_numbers = #tpu.dot_dimension_numbers<[1], [0], [0], [1], [0, 0, 1, 1], [], []>} : vector<8x128xf32>, vector<128x128xf32>, vector<8x128xf32> -> vector<8x128xf32>
    %cst_21 = arith.constant dense<0.000000e+00> : vector<8x8xf32>
    %61 = tpu.matmul %60, %60, %cst_21 {dimension_numbers = #tpu.dot_dimension_numbers<[1], [1], [0], [0], [0, 0, 1, 0], [], []>} : vector<8x128xf32>, vector<8x128xf32>, vector<8x8xf32> -> vector<8x8xf32>
    %62 = arith.mulf %60, %60 : vector<8x128xf32>
    %cst_22 = arith.constant dense<0.000000e+00> : vector<8xf32>
    %63 = vector.multi_reduction <add>, %62, %cst_22 [1] : vector<8x128xf32> to vector<8xf32>
    %64 = vector.shape_cast %63 : vector<8xf32> to vector<8x1xf32>
    %65 = tpu.transpose %64, [1, 0] : vector<8x1xf32> -> vector<1x8xf32>
    %66 = vector.broadcast %64 : vector<8x1xf32> to vector<8x8xf32>
    %67 = vector.broadcast %65 : vector<1x8xf32> to vector<8x8xf32>
    %68 = arith.addf %66, %67 : vector<8x8xf32>
    %cst_23 = arith.constant 2.000000e+00 : f32
    %69 = vector.broadcast %cst_23 : f32 to vector<8x8xf32>
    %70 = arith.mulf %69, %61 : vector<8x8xf32>
    %71 = arith.subf %68, %70 : vector<8x8xf32>
    %cst_24 = arith.constant 0.000000e+00 : f32
    %72 = vector.broadcast %cst_24 : f32 to vector<8x8xf32>
    %73 = arith.maximumf %71, %72 : vector<8x8xf32>
    %74 = tpu.iota {dimensions = array<i32: 0>} : vector<8x8xi32>
    %75 = tpu.iota {dimensions = array<i32: 1>} : vector<8x8xi32>
    %76 = arith.cmpi eq, %74, %75 : vector<8x8xi32>
    %cst_25 = arith.constant 0.000000e+00 : f32
    %77 = vector.broadcast %cst_25 : f32 to vector<8x8xf32>
    %78 = arith.select %76, %77, %73 : vector<8x8xi1>, vector<8x8xf32>
    %79 = math.sqrt %78 : vector<8x8xf32>
    %c0_26 = arith.constant 0 : index
    %c0_27 = arith.constant 0 : index
    %80 = vector.load %arg4[%c0_26, %c0_27] : memref<8x8xf32, #tpu.memory_space<vmem>>, vector<8x8xf32>
    tpu.vector_store %arg4[%c0_26, %c0_27], %79 {strides = array<i32>} : memref<8x8xf32, #tpu.memory_space<vmem>>, vector<8x8xf32>,
    return
  }
}

</mosaic_0001>

<llo_original>
// kernel: tpu_custom_call.1
$region0: #{tpu_custom_call.1}
  #allocation0 [shape = 'u32[]', space=smem, size = 0x4, offset = 0x4, fixed_abs, tag = 'smem constant byte address 0x4 - core index']
  #allocation1 [shape = 'u32[144,128]{1,0:T(1,128)}', space=vmem, size = 0x12000, scoped, tag = 'internal scratch']
  %s0 = inlined_call_operand.vmem [shape: f32[8,1], index: 0, kind: input, shape index: {}]
  %s1 = inlined_call_operand.vmem [shape: f32[128,32], index: 1, kind: input, shape index: {}]
  %s2 = inlined_call_operand.vmem [shape: f32[96,128], index: 2, kind: input, shape index: {}]
  %s3 = inlined_call_operand.vmem [shape: f32[1,128], index: 3, kind: input, shape index: {}]
  %s4 = inlined_call_operand.hbm [shape: f32[8,8], index: 4, kind: output, shape index: {}]
  %s5 = sld [smem:[#allocation0]]
  $region26: #{tpu_custom_call.1} parent=0
    _
  %s7 = ssub.s32 1, %s5
  %s8 = scalar_select 0, %s7, %s5
  $region1: #{tpu_custom_call.1} parent=0
    #allocation2 [shape = 'u8[4096]{0}', space=vmem, size = 0x1000, scoped, tag = 'output window, operand 0, single buffered']
    #allocation3 [shape = 's32[1]{0}', space=sflag, size = 0x4, scoped, tag = 'scoped memory for tpu_custom_call.1']
    %9 = vsyncpa [#allocation3], 0
    // Predicated region
    $region2: #{tpu_custom_call.1} parent=1 // pred_check
      _
    $region3: #{tpu_custom_call.1} parent=1 // pred_check_branch
      %11 = sbr.rel (0) target = $region5
    $region4: #{tpu_custom_call.1} parent=1 // pred_region
      _
    $region5: #{tpu_custom_call.1} parent=1 // pred_fallthru
      _
    // Predicated region
    $region6: #{tpu_custom_call.1} parent=1 // pred_check
      _
    $region7: #{tpu_custom_call.1} parent=1 // pred_check_branch
      %13 = sbr.rel (0) target = $region9
    $region8: #{tpu_custom_call.1} parent=1 // pred_region
      _
    $region9: #{tpu_custom_call.1} parent=1 // pred_fallthru
      _
    // Predicated region
    $region10: #{tpu_custom_call.1} parent=1 // pred_check
      _
    $region11: #{tpu_custom_call.1} parent=1 // pred_check_branch
      %15 = sbr.rel (0) target = $region13
    $region12: #{tpu_custom_call.1} parent=1 // pred_region
      _
    $region13: #{tpu_custom_call.1} parent=1 // pred_fallthru
      _
    // Predicated region
    $region14: #{tpu_custom_call.1} parent=1 // pred_check
      _
    $region15: #{tpu_custom_call.1} parent=1 // pred_check_branch
      %17 = sbr.rel (0) target = $region17
    $region16: #{tpu_custom_call.1} parent=1 // pred_region
      _
    $region17: #{tpu_custom_call.1} parent=1 // pred_fallthru
      _
    %v18 = vld [vmem:[%s1] sm:$0xff]
    %v19 = vld [vmem:[%s1 + $0x8] sm:$0xff]
    %v20 = vld [vmem:[%s1 + $0x10] sm:$0xff]
    %v21 = vld [vmem:[%s1 + $0x18] sm:$0xff]
    %v22 = vld [vmem:[%s1 + $0x20] sm:$0xff]
    %v23 = vld [vmem:[%s1 + $0x28] sm:$0xff]
    %v24 = vld [vmem:[%s1 + $0x30] sm:$0xff]
    %v25 = vld [vmem:[%s1 + $0x38] sm:$0xff]
    %v26 = vld [vmem:[%s1 + $0x40] sm:$0xff]
    %v27 = vld [vmem:[%s1 + $0x48] sm:$0xff]
    %v28 = vld [vmem:[%s1 + $0x50] sm:$0xff]
    %v29 = vld [vmem:[%s1 + $0x58] sm:$0xff]
    %v30 = vld [vmem:[%s1 + $0x60] sm:$0xff]
    %v31 = vld [vmem:[%s1 + $0x68] sm:$0xff]
    %v32 = vld [vmem:[%s1 + $0x70] sm:$0xff]
    %v33 = vld [vmem:[%s1 + $0x78] sm:$0xff]
    %v34 = vlaneseq
    %v35 = vshrl.u32 %v34, 7
    %v36 = vadd.s32 %v35, 8
    %v37 = vadd.s32 %v35, 16
    %v38 = vadd.s32 %v35, 24
    %v39 = vadd.s32 %v35, 32
    %v40 = vadd.s32 %v35, 40
    %v41 = vadd.s32 %v35, 48
    %v42 = vadd.s32 %v35, 56
    %v43 = vadd.s32 %v35, 64
    %v44 = vadd.s32 %v35, 72
    %v45 = vadd.s32 %v35, 80
    %v46 = vadd.s32 %v35, 88
    %v47 = vadd.s32 %v35, 96
    %v48 = vadd.s32 %v35, 104
    %v49 = vadd.s32 %v35, 112
    %v50 = vadd.s32 %v35, 120
    %vm51 = vcmp.lt.s32.totalorder %v35, 0
    %v52 = vsub.s32 0, %v35
    %v53 = vsel %vm51, %v52, %v35
    %v54 = vshrl.u32 %v53, 4
    %v55 = vand.u32 %v53, 15
    %v56 = vsub.s32 0, %v55
    %v57 = vsel %vm51, %v56, %v55
    %vm58 = vcmp.lt.s32.totalorder %v36, 0
    %v59 = vsub.s32 0, %v36
    %v60 = vsel %vm58, %v59, %v36
    %v61 = vshrl.u32 %v60, 4
    %v62 = vand.u32 %v60, 15
    %v63 = vsub.s32 0, %v62
    %v64 = vsel %vm58, %v63, %v62
    %vm65 = vcmp.lt.s32.totalorder %v37, 0
    %v66 = vsub.s32 0, %v37
    %v67 = vsel %vm65, %v66, %v37
    %v68 = vshrl.u32 %v67, 4
    %v69 = vand.u32 %v67, 15
    %v70 = vsub.s32 0, %v69
    %v71 = vsel %vm65, %v70, %v69
    %vm72 = vcmp.lt.s32.totalorder %v38, 0
    %v73 = vsub.s32 0, %v38
    %v74 = vsel %vm72, %v73, %v38
    %v75 = vshrl.u32 %v74, 4
    %v76 = vand.u32 %v74, 15
    %v77 = vsub.s32 0, %v76
    %v78 = vsel %vm72, %v77, %v76
    %vm79 = vcmp.lt.s32.totalorder %v39, 0
    %v80 = vsub.s32 0, %v39
    %v81 = vsel %vm79, %v80, %v39
    %v82 = vshrl.u32 %v81, 4
    %v83 = vand.u32 %v81, 15
    %v84 = vsub.s32 0, %v83
    %v85 = vsel %vm79, %v84, %v83
    %vm86 = vcmp.lt.s32.totalorder %v40, 0
    %v87 = vsub.s32 0, %v40
    %v88 = vsel %vm86, %v87, %v40
    %v89 = vshrl.u32 %v88, 4
    %v90 = vand.u32 %v88, 15
    %v91 = vsub.s32 0, %v90
    %v92 = vsel %vm86, %v91, %v90
    %vm93 = vcmp.lt.s32.totalorder %v41, 0
    %v94 = vsub.s32 0, %v41
    %v95 = vsel %vm93, %v94, %v41
    %v96 = vshrl.u32 %v95, 4
    %v97 = vand.u32 %v95, 15
    %v98 = vsub.s32 0, %v97
    %v99 = vsel %vm93, %v98, %v97
    %vm100 = vcmp.lt.s32.totalorder %v42, 0
    %v101 = vsub.s32 0, %v42
    %v102 = vsel %vm100, %v101, %v42
    %v103 = vshrl.u32 %v102, 4
    %v104 = vand.u32 %v102, 15
    %v105 = vsub.s32 0, %v104
    %v106 = vsel %vm100, %v105, %v104
    %vm107 = vcmp.lt.s32.totalorder %v43, 0
    %v108 = vsub.s32 0, %v43
    %v109 = vsel %vm107, %v108, %v43
    %v110 = vshrl.u32 %v109, 4
    %v111 = vand.u32 %v109, 15
    %v112 = vsub.s32 0, %v111
    %v113 = vsel %vm107, %v112, %v111
    %vm114 = vcmp.lt.s32.totalorder %v44, 0
    %v115 = vsub.s32 0, %v44
    %v116 = vsel %vm114, %v115, %v44
    %v117 = vshrl.u32 %v116, 4
    %v118 = vand.u32 %v116, 15
    %v119 = vsub.s32 0, %v118
    %v120 = vsel %vm114, %v119, %v118
    %vm121 = vcmp.lt.s32.totalorder %v45, 0
    %v122 = vsub.s32 0, %v45
    %v123 = vsel %vm121, %v122, %v45
    %v124 = vshrl.u32 %v123, 4
    %v125 = vand.u32 %v123, 15
    %v126 = vsub.s32 0, %v125
    %v127 = vsel %vm121, %v126, %v125
    %vm128 = vcmp.lt.s32.totalorder %v46, 0
    %v129 = vsub.s32 0, %v46
    %v130 = vsel %vm128, %v129, %v46
    %v131 = vshrl.u32 %v130, 4
    %v132 = vand.u32 %v130, 15
    %v133 = vsub.s32 0, %v132
    %v134 = vsel %vm128, %v133, %v132
    %vm135 = vcmp.lt.s32.totalorder %v47, 0
    %v136 = vsub.s32 0, %v47
    %v137 = vsel %vm135, %v136, %v47
    %v138 = vshrl.u32 %v137, 4
    %v139 = vand.u32 %v137, 15
    %v140 = vsub.s32 0, %v139
    %v141 = vsel %vm135, %v140, %v139
    %vm142 = vcmp.lt.s32.totalorder %v48, 0
    %v143 = vsub.s32 0, %v48
    %v144 = vsel %vm142, %v143, %v48
    %v145 = vshrl.u32 %v144, 4
    %v146 = vand.u32 %v144, 15
    %v147 = vsub.s32 0, %v146
    %v148 = vsel %vm142, %v147, %v146
    %vm149 = vcmp.lt.s32.totalorder %v49, 0
    %v150 = vsub.s32 0, %v49
    %v151 = vsel %vm149, %v150, %v49
    %v152 = vshrl.u32 %v151, 4
    %v153 = vand.u32 %v151, 15
    %v154 = vsub.s32 0, %v153
    %v155 = vsel %vm149, %v154, %v153
    %vm156 = vcmp.lt.s32.totalorder %v50, 0
    %v157 = vsub.s32 0, %v50
    %v158 = vsel %vm156, %v157, %v50
    %v159 = vshrl.u32 %v158, 4
    %v160 = vand.u32 %v158, 15
    %v161 = vsub.s32 0, %v160
    %v162 = vsel %vm156, %v161, %v160
    %vm163 = vcmp.ne.s32.totalorder %v57, 0
    %vm164 = vcmp.ne.s32.totalorder %v64, 0
    %vm165 = vcmp.ne.s32.totalorder %v71, 0
    %vm166 = vcmp.ne.s32.totalorder %v78, 0
    %vm167 = vcmp.ne.s32.totalorder %v85, 0
    %vm168 = vcmp.ne.s32.totalorder %v92, 0
    %vm169 = vcmp.ne.s32.totalorder %v99, 0
    %vm170 = vcmp.ne.s32.totalorder %v106, 0
    %vm171 = vcmp.ne.s32.totalorder %v113, 0
    %vm172 = vcmp.ne.s32.totalorder %v120, 0
    %vm173 = vcmp.ne.s32.totalorder %v127, 0
    %vm174 = vcmp.ne.s32.totalorder %v134, 0
    %vm175 = vcmp.ne.s32.totalorder %v141, 0
    %vm176 = vcmp.ne.s32.totalorder %v148, 0
    %vm177 = vcmp.ne.s32.totalorder %v155, 0
    %vm178 = vcmp.ne.s32.totalorder %v162, 0
    %vm179 = vcmp.lt.s32.totalorder %v57, 0
    %vm180 = vcmp.lt.s32.totalorder %v64, 0
    %vm181 = vcmp.lt.s32.totalorder %v71, 0
    %vm182 = vcmp.lt.s32.totalorder %v78, 0
    %vm183 = vcmp.lt.s32.totalorder %v85, 0
    %vm184 = vcmp.lt.s32.totalorder %v92, 0
    %vm185 = vcmp.lt.s32.totalorder %v99, 0
    %vm186 = vcmp.lt.s32.totalorder %v106, 0
    %vm187 = vcmp.lt.s32.totalorder %v113, 0
    %vm188 = vcmp.lt.s32.totalorder %v120, 0
    %vm189 = vcmp.lt.s32.totalorder %v127, 0
    %vm190 = vcmp.lt.s32.totalorder %v134, 0
    %vm191 = vcmp.lt.s32.totalorder %v141, 0
    %vm192 = vcmp.lt.s32.totalorder %v148, 0
    %vm193 = vcmp.lt.s32.totalorder %v155, 0
    %vm194 = vcmp.lt.s32.totalorder %v162, 0
    %vm195 = vmand %vm179, %vm163
    %vm196 = vmand %vm180, %vm164
    %vm197 = vmand %vm181, %vm165
    %vm198 = vmand %vm182, %vm166
    %vm199 = vmand %vm183, %vm167
    %vm200 = vmand %vm184, %vm168
    %vm201 = vmand %vm185, %vm169
    %vm202 = vmand %vm186, %vm170
    %vm203 = vmand %vm187, %vm171
    %vm204 = vmand %vm188, %vm172
    %vm205 = vmand %vm189, %vm173
    %vm206 = vmand %vm190, %vm174
    %vm207 = vmand %vm191, %vm175
    %vm208 = vmand %vm192, %vm176
    %vm209 = vmand %vm193, %vm177
    %vm210 = vmand %vm194, %vm178
    %v211 = vadd.s32 %v57, 16
    %v212 = vadd.s32 %v64, 16
    %v213 = vadd.s32 %v71, 16
    %v214 = vadd.s32 %v78, 16
    %v215 = vadd.s32 %v85, 16
    %v216 = vadd.s32 %v92, 16
    %v217 = vadd.s32 %v99, 16
    %v218 = vadd.s32 %v106, 16
    %v219 = vadd.s32 %v113, 16
    %v220 = vadd.s32 %v120, 16
    %v221 = vadd.s32 %v127, 16
    %v222 = vadd.s32 %v134, 16
    %v223 = vadd.s32 %v141, 16
    %v224 = vadd.s32 %v148, 16
    %v225 = vadd.s32 %v155, 16
    %v226 = vadd.s32 %v162, 16
    %v227 = vsel %vm195, %v211, %v57
    %v228 = vsel %vm196, %v212, %v64
    %v229 = vsel %vm197, %v213, %v71
    %v230 = vsel %vm198, %v214, %v78
    %v231 = vsel %vm199, %v215, %v85
    %v232 = vsel %vm200, %v216, %v92
    %v233 = vsel %vm201, %v217, %v99
    %v234 = vsel %vm202, %v218, %v106
    %v235 = vsel %vm203, %v219, %v113
    %v236 = vsel %vm204, %v220, %v120
    %v237 = vsel %vm205, %v221, %v127
    %v238 = vsel %vm206, %v222, %v134
    %v239 = vsel %vm207, %v223, %v141
    %v240 = vsel %vm208, %v224, %v148
    %v241 = vsel %vm209, %v225, %v155
    %v242 = vsel %vm210, %v226, %v162
    %vm243 = vcmp.eq.s32.totalorder %v227, 0
    %vm244 = vcmp.eq.s32.totalorder %v228, 0
    %vm245 = vcmp.eq.s32.totalorder %v229, 0
    %vm246 = vcmp.eq.s32.totalorder %v230, 0
    %vm247 = vcmp.eq.s32.totalorder %v231, 0
    %vm248 = vcmp.eq.s32.totalorder %v232, 0
    %vm249 = vcmp.eq.s32.totalorder %v233, 0
    %vm250 = vcmp.eq.s32.totalorder %v234, 0
    %vm251 = vcmp.eq.s32.totalorder %v235, 0
    %vm252 = vcmp.eq.s32.totalorder %v236, 0
    %vm253 = vcmp.eq.s32.totalorder %v237, 0
    %vm254 = vcmp.eq.s32.totalorder %v238, 0
    %vm255 = vcmp.eq.s32.totalorder %v239, 0
    %vm256 = vcmp.eq.s32.totalorder %v240, 0
    %vm257 = vcmp.eq.s32.totalorder %v241, 0
    %vm258 = vcmp.eq.s32.totalorder %v242, 0
    %vm259 = vcmp.eq.s32.totalorder %v227, 15
    %vm260 = vcmp.eq.s32.totalorder %v228, 15
    %vm261 = vcmp.eq.s32.totalorder %v229, 15
    %vm262 = vcmp.eq.s32.totalorder %v230, 15
    %vm263 = vcmp.eq.s32.totalorder %v231, 15
    %vm264 = vcmp.eq.s32.totalorder %v232, 15
    %vm265 = vcmp.eq.s32.totalorder %v233, 15
    %vm266 = vcmp.eq.s32.totalorder %v234, 15
    %vm267 = vcmp.eq.s32.totalorder %v235, 15
    %vm268 = vcmp.eq.s32.totalorder %v236, 15
    %vm269 = vcmp.eq.s32.totalorder %v237, 15
    %vm270 = vcmp.eq.s32.totalorder %v238, 15
    %vm271 = vcmp.eq.s32.totalorder %v239, 15
    %vm272 = vcmp.eq.s32.totalorder %v240, 15
    %vm273 = vcmp.eq.s32.totalorder %v241, 15
    %vm274 = vcmp.eq.s32.totalorder %v242, 15
    %v275 = vrot.slane %v18, 7
    %v276 = vrot.slane %v19, 7
    %v277 = vrot.slane %v20, 7
    %v278 = vrot.slane %v21, 7
    %v279 = vrot.slane %v22, 7
    %v280 = vrot.slane %v23, 7
    %v281 = vrot.slane %v24, 7
    %v282 = vrot.slane %v25, 7
    %v283 = vrot.slane %v26, 7
    %v284 = vrot.slane %v27, 7
    %v285 = vrot.slane %v28, 7
    %v286 = vrot.slane %v29, 7
    %v287 = vrot.slane %v30, 7
    %v288 = vrot.slane %v31, 7
    %v289 = vrot.slane %v32, 7
    %v290 = vrot.slane %v33, 7
    %vm291 = vcmp.lt.s32.totalorder %v35, 1
    %v292 = vsel %vm291, %v289, %v290
    %v293 = vsel %vm291, %v288, %v289
    %v294 = vsel %vm291, %v287, %v288
    %v295 = vsel %vm291, %v286, %v287
    %v296 = vsel %vm291, %v285, %v286
    %v297 = vsel %vm291, %v284, %v285
    %v298 = vsel %vm291, %v283, %v284
    %v299 = vsel %vm291, %v282, %v283
    %v300 = vsel %vm291, %v281, %v282
    %v301 = vsel %vm291, %v280, %v281
    %v302 = vsel %vm291, %v279, %v280
    %v303 = vsel %vm291, %v278, %v279
    %v304 = vsel %vm291, %v277, %v278
    %v305 = vsel %vm291, %v276, %v277
    %v306 = vsel %vm291, %v275, %v276
    %v307 = vsel %vm291, %v290, %v275
    %v308 = vsel %vm243, 1, 0
    %v309 = vsel %vm244, 1, 0
    %v310 = vsel %vm245, 1, 0
    %v311 = vsel %vm246, 1, 0
    %v312 = vsel %vm247, 1, 0
    %v313 = vsel %vm248, 1, 0
    %v314 = vsel %vm249, 1, 0
    %v315 = vsel %vm250, 1, 0
    %v316 = vsel %vm251, 1, 0
    %v317 = vsel %vm252, 1, 0
    %v318 = vsel %vm253, 1, 0
    %v319 = vsel %vm254, 1, 0
    %v320 = vsel %vm255, 1, 0
    %v321 = vsel %vm256, 1, 0
    %v322 = vsel %vm257, 1, 0
    %v323 = vsel %vm258, 1, 0
    %vm324 = vcmp.eq.s32.totalorder %v308, 1
    %vm325 = vcmp.eq.s32.totalorder %v309, 1
    %vm326 = vcmp.eq.s32.totalorder %v310, 1
    %vm327 = vcmp.eq.s32.totalorder %v311, 1
    %vm328 = vcmp.eq.s32.totalorder %v312, 1
    %vm329 = vcmp.eq.s32.totalorder %v313, 1
    %vm330 = vcmp.eq.s32.totalorder %v314, 1
    %vm331 = vcmp.eq.s32.totalorder %v315, 1
    %vm332 = vcmp.eq.s32.totalorder %v316, 1
    %vm333 = vcmp.eq.s32.totalorder %v317, 1
    %vm334 = vcmp.eq.s32.totalorder %v318, 1
    %vm335 = vcmp.eq.s32.totalorder %v319, 1
    %vm336 = vcmp.eq.s32.totalorder %v320, 1
    %vm337 = vcmp.eq.s32.totalorder %v321, 1
    %vm338 = vcmp.eq.s32.totalorder %v322, 1
    %vm339 = vcmp.eq.s32.totalorder %v323, 1
    %v340 = vsel %vm324, 0.0, %v307
    %v341 = vsel %vm325, 0.0, %v306
    %v342 = vsel %vm326, 0.0, %v305
    %v343 = vsel %vm327, 0.0, %v304
    %v344 = vsel %vm328, 0.0, %v303
    %v345 = vsel %vm329, 0.0, %v302
    %v346 = vsel %vm330, 0.0, %v301
    %v347 = vsel %vm331, 0.0, %v300
    %v348 = vsel %vm332, 0.0, %v299
    %v349 = vsel %vm333, 0.0, %v298
    %v350 = vsel %vm334, 0.0, %v297
    %v351 = vsel %vm335, 0.0, %v296
    %v352 = vsel %vm336, 0.0, %v295
    %v353 = vsel %vm337, 0.0, %v294
    %v354 = vsel %vm338, 0.0, %v293
    %v355 = vsel %vm339, 0.0, %v292
    %v356 = vrot.slane %v18, 1
    %v357 = vrot.slane %v19, 1
    %v358 = vrot.slane %v20, 1
    %v359 = vrot.slane %v21, 1
    %v360 = vrot.slane %v22, 1
    %v361 = vrot.slane %v23, 1
    %v362 = vrot.slane %v24, 1
    %v363 = vrot.slane %v25, 1
    %v364 = vrot.slane %v26, 1
    %v365 = vrot.slane %v27, 1
    %v366 = vrot.slane %v28, 1
    %v367 = vrot.slane %v29, 1
    %v368 = vrot.slane %v30, 1
    %v369 = vrot.slane %v31, 1
    %v370 = vrot.slane %v32, 1
    %v371 = vrot.slane %v33, 1
    %vm372 = vcmp.lt.s32.totalorder %v35, 7
    %v373 = vsel %vm372, %v370, %v371
    %v374 = vsel %vm372, %v369, %v370
    %v375 = vsel %vm372, %v368, %v369
    %v376 = vsel %vm372, %v367, %v368
    %v377 = vsel %vm372, %v366, %v367
    %v378 = vsel %vm372, %v365, %v366
    %v379 = vsel %vm372, %v364, %v365
    %v380 = vsel %vm372, %v363, %v364
    %v381 = vsel %vm372, %v362, %v363
    %v382 = vsel %vm372, %v361, %v362
    %v383 = vsel %vm372, %v360, %v361
    %v384 = vsel %vm372, %v359, %v360
    %v385 = vsel %vm372, %v358, %v359
    %v386 = vsel %vm372, %v357, %v358
    %v387 = vsel %vm372, %v356, %v357
    %v388 = vsel %vm372, %v371, %v356
    %v389 = vsel %vm259, 1, 0
    %v390 = vsel %vm260, 1, 0
    %v391 = vsel %vm261, 1, 0
    %v392 = vsel %vm262, 1, 0
    %v393 = vsel %vm263, 1, 0
    %v394 = vsel %vm264, 1, 0
    %v395 = vsel %vm265, 1, 0
    %v396 = vsel %vm266, 1, 0
    %v397 = vsel %vm267, 1, 0
    %v398 = vsel %vm268, 1, 0
    %v399 = vsel %vm269, 1, 0
    %v400 = vsel %vm270, 1, 0
    %v401 = vsel %vm271, 1, 0
    %v402 = vsel %vm272, 1, 0
    %v403 = vsel %vm273, 1, 0
    %v404 = vsel %vm274, 1, 0
    %vm405 = vcmp.eq.s32.totalorder %v389, 1
    %vm406 = vcmp.eq.s32.totalorder %v390, 1
    %vm407 = vcmp.eq.s32.totalorder %v391, 1
    %vm408 = vcmp.eq.s32.totalorder %v392, 1
    %vm409 = vcmp.eq.s32.totalorder %v393, 1
    %vm410 = vcmp.eq.s32.totalorder %v394, 1
    %vm411 = vcmp.eq.s32.totalorder %v395, 1
    %vm412 = vcmp.eq.s32.totalorder %v396, 1
    %vm413 = vcmp.eq.s32.totalorder %v397, 1
    %vm414 = vcmp.eq.s32.totalorder %v398, 1
    %vm415 = vcmp.eq.s32.totalorder %v399, 1
    %vm416 = vcmp.eq.s32.totalorder %v400, 1
    %vm417 = vcmp.eq.s32.totalorder %v401, 1
    %vm418 = vcmp.eq.s32.totalorder %v402, 1
    %vm419 = vcmp.eq.s32.totalorder %v403, 1
    %vm420 = vcmp.eq.s32.totalorder %v404, 1
    %v421 = vsel %vm405, 0.0, %v387
    %v422 = vsel %vm406, 0.0, %v386
    %v423 = vsel %vm407, 0.0, %v385
    %v424 = vsel %vm408, 0.0, %v384
    %v425 = vsel %vm409, 0.0, %v383
    %v426 = vsel %vm410, 0.0, %v382
    %v427 = vsel %vm411, 0.0, %v381
    %v428 = vsel %vm412, 0.0, %v380
    %v429 = vsel %vm413, 0.0, %v379
    %v430 = vsel %vm414, 0.0, %v378
    %v431 = vsel %vm415, 0.0, %v377
    %v432 = vsel %vm416, 0.0, %v376
    %v433 = vsel %vm417, 0.0, %v375
    %v434 = vsel %vm418, 0.0, %v374
    %v435 = vsel %vm419, 0.0, %v373
    %v436 = vsel %vm420, 0.0, %v388
    %453 = vrot.lane.b32.xlu0 %v18, 32
    %v454 = vpop.permute.xlu0 %453
    %455 = vrot.lane.b32.xlu0 %v19, 32
    %v456 = vpop.permute.xlu0 %455
    %457 = vrot.lane.b32.xlu0 %v20, 32
    %v458 = vpop.permute.xlu0 %457
    %459 = vrot.lane.b32.xlu0 %v21, 32
    %v460 = vpop.permute.xlu0 %459
    %461 = vrot.lane.b32.xlu0 %v22, 32
    %v462 = vpop.permute.xlu0 %461
    %463 = vrot.lane.b32.xlu0 %v23, 32
    %v464 = vpop.permute.xlu0 %463
    %465 = vrot.lane.b32.xlu0 %v24, 32
    %v466 = vpop.permute.xlu0 %465
    %467 = vrot.lane.b32.xlu0 %v25, 32
    %v468 = vpop.permute.xlu0 %467
    %469 = vrot.lane.b32.xlu0 %v26, 32
    %v470 = vpop.permute.xlu0 %469
    %471 = vrot.lane.b32.xlu0 %v27, 32
    %v472 = vpop.permute.xlu0 %471
    %473 = vrot.lane.b32.xlu0 %v28, 32
    %v474 = vpop.permute.xlu0 %473
    %475 = vrot.lane.b32.xlu0 %v29, 32
    %v476 = vpop.permute.xlu0 %475
    %477 = vrot.lane.b32.xlu0 %v30, 32
    %v478 = vpop.permute.xlu0 %477
    %479 = vrot.lane.b32.xlu0 %v31, 32
    %v480 = vpop.permute.xlu0 %479
    %481 = vrot.lane.b32.xlu0 %v32, 32
    %v482 = vpop.permute.xlu0 %481
    %483 = vrot.lane.b32.xlu0 %v33, 32
    %v484 = vpop.permute.xlu0 %483
    %517 = vrot.lane.b32.xlu0 %v421, 64
    %v518 = vpop.permute.xlu0 %517
    %519 = vrot.lane.b32.xlu0 %v422, 64
    %v520 = vpop.permute.xlu0 %519
    %521 = vrot.lane.b32.xlu0 %v423, 64
    %v522 = vpop.permute.xlu0 %521
    %523 = vrot.lane.b32.xlu0 %v424, 64
    %v524 = vpop.permute.xlu0 %523
    %525 = vrot.lane.b32.xlu0 %v425, 64
    %v526 = vpop.permute.xlu0 %525
    %527 = vrot.lane.b32.xlu0 %v426, 64
    %v528 = vpop.permute.xlu0 %527
    %529 = vrot.lane.b32.xlu0 %v427, 64
    %v530 = vpop.permute.xlu0 %529
    %531 = vrot.lane.b32.xlu0 %v428, 64
    %v532 = vpop.permute.xlu0 %531
    %533 = vrot.lane.b32.xlu0 %v429, 64
    %v534 = vpop.permute.xlu0 %533
    %535 = vrot.lane.b32.xlu0 %v430, 64
    %v536 = vpop.permute.xlu0 %535
    %537 = vrot.lane.b32.xlu0 %v431, 64
    %v538 = vpop.permute.xlu0 %537
    %539 = vrot.lane.b32.xlu0 %v432, 64
    %v540 = vpop.permute.xlu0 %539
    %541 = vrot.lane.b32.xlu0 %v433, 64
    %v542 = vpop.permute.xlu0 %541
    %543 = vrot.lane.b32.xlu0 %v434, 64
    %v544 = vpop.permute.xlu0 %543
    %545 = vrot.lane.b32.xlu0 %v435, 64
    %v546 = vpop.permute.xlu0 %545
    %547 = vrot.lane.b32.xlu0 %v436, 64
    %v548 = vpop.permute.xlu0 %547
    %vm565 = vcmask 261120
    %v566 = vsel %vm565, %v340, %v454
    %v567 = vsel %vm565, %v341, %v456
    %v568 = vsel %vm565, %v342, %v458
    %v569 = vsel %vm565, %v343, %v460
    %v570 = vsel %vm565, %v344, %v462
    %v571 = vsel %vm565, %v345, %v464
    %v572 = vsel %vm565, %v346, %v466
    %v573 = vsel %vm565, %v347, %v468
    %v574 = vsel %vm565, %v348, %v470
    %v575 = vsel %vm565, %v349, %v472
    %v576 = vsel %vm565, %v350, %v474
    %v577 = vsel %vm565, %v351, %v476
    %v578 = vsel %vm565, %v352, %v478
    %v579 = vsel %vm565, %v353, %v480
    %v580 = vsel %vm565, %v354, %v482
    %v581 = vsel %vm565, %v355, %v484
    %vm582 = vcmask 523264
    %v583 = vsel %vm582, %v566, %v518
    %v584 = vsel %vm582, %v567, %v520
    %v585 = vsel %vm582, %v568, %v522
    %v586 = vsel %vm582, %v569, %v524
    %v587 = vsel %vm582, %v570, %v526
    %v588 = vsel %vm582, %v571, %v528
    %v589 = vsel %vm582, %v572, %v530
    %v590 = vsel %vm582, %v573, %v532
    %v591 = vsel %vm582, %v574, %v534
    %v592 = vsel %vm582, %v575, %v536
    %v593 = vsel %vm582, %v576, %v538
    %v594 = vsel %vm582, %v577, %v540
    %v595 = vsel %vm582, %v578, %v542
    %v596 = vsel %vm582, %v579, %v544
    %v597 = vsel %vm582, %v580, %v546
    %v598 = vsel %vm582, %v581, %v548
    %v599 = vld [vmem:[%s2] sm:$0xff]
    %v600 = vld [vmem:[%s2 + $0x8] sm:$0xff]
    %v601 = vld [vmem:[%s2 + $0x10] sm:$0xff]
    %v602 = vld [vmem:[%s2 + $0x18] sm:$0xff]
    %v603 = vld [vmem:[%s2 + $0x20] sm:$0xff]
    %v604 = vld [vmem:[%s2 + $0x28] sm:$0xff]
    %v605 = vld [vmem:[%s2 + $0x30] sm:$0xff]
    %v606 = vld [vmem:[%s2 + $0x38] sm:$0xff]
    %v607 = vld [vmem:[%s2 + $0x40] sm:$0xff]
    %v608 = vld [vmem:[%s2 + $0x48] sm:$0xff]
    %v609 = vld [vmem:[%s2 + $0x50] sm:$0xff]
    %v610 = vld [vmem:[%s2 + $0x58] sm:$0xff]
    %v611 = vld [vmem:[%s3] sm:$0x1]
    %v613 = vlaneseq
    %v614 = vshrl.u32 %v613, 7
    %v615 = vsub.s32 0, %v614
    %v616 = vrot.slane %v611, %v615
    %vm618 = vcmask 785408
    %v620 = vsel %vm618, %v583, 0
    %v623 = vsel %vm618, %v584, 0
    %v626 = vsel %vm618, %v585, 0
    %v629 = vsel %vm618, %v586, 0
    %v632 = vsel %vm618, %v587, 0
    %v635 = vsel %vm618, %v588, 0
    %v638 = vsel %vm618, %v589, 0
    %v641 = vsel %vm618, %v590, 0
    %v644 = vsel %vm618, %v591, 0
    %v647 = vsel %vm618, %v592, 0
    %v650 = vsel %vm618, %v593, 0
    %v653 = vsel %vm618, %v594, 0
    %v656 = vsel %vm618, %v595, 0
    %v659 = vsel %vm618, %v596, 0
    %v662 = vsel %vm618, %v597, 0
    %v665 = vsel %vm618, %v598, 0
    %667 = vmatprep.subr.mxu0 0.0
    %668 = vmatpush1.msra.mxu0 %v599
    %669 = vmatprep.subr.mxu0 0.0
    %670 = vmatpush1.msra.mxu0 %v600
    %671 = vmatprep.subr.mxu0 0.0
    %672 = vmatpush1.msra.mxu0 %v601
    %673 = vmatprep.subr.mxu0 0.0
    %674 = vmatpush1.msra.mxu0 %v602
    %675 = vmatprep.subr.mxu0 0.0
    %676 = vmatpush1.msra.mxu0 %v603
    %677 = vmatprep.subr.mxu0 0.0
    %678 = vmatpush1.msra.mxu0 %v604
    %679 = vmatprep.subr.mxu0 0.0
    %680 = vmatpush1.msra.mxu0 %v605
    %681 = vmatprep.subr.mxu0 0.0
    %682 = vmatpush1.msra.mxu0 %v606
    %683 = vmatprep.subr.mxu0 0.0
    %684 = vmatpush1.msra.mxu0 %v607
    %685 = vmatprep.subr.mxu0 0.0
    %686 = vmatpush1.msra.mxu0 %v608
    %687 = vmatprep.subr.mxu0 0.0
    %688 = vmatpush1.msra.mxu0 %v609
    %689 = vmatprep.subr.mxu0 0.0
    %690 = vmatpush1.msra.mxu0 %v610
    %691 = vmatprep.subr.mxu0 0.0
    %692 = vmatpush1.msra.mxu0 0.0
    %693 = vmatprep.subr.mxu0 0.0
    %694 = vmatpush1.msra.mxu0 0.0
    %695 = vmatprep.subr.mxu0 0.0
    %696 = vmatpush1.msra.mxu0 0.0
    %697 = vmatprep.subr.mxu0 0.0
    %698 = vmatpush1.msra.mxu0 0.0
    %699 = vmatprep.subr.mxu0 0.0
    %700 = vmatpush1.msra.mxu0 0.0
    %701 = vmatprep.subr.mxu0 0.0
    %702 = vmatpush1.msra.mxu0 0.0
    %703 = vmatprep.subr.mxu0 0.0
    %704 = vmatpush1.msra.mxu0 0.0
    %705 = vmatprep.subr.mxu0 0.0
    %706 = vmatpush1.msra.mxu0 0.0
    %707 = vmatprep.subr.mxu0 0.0
    %708 = vmatpush1.msra.mxu0 0.0
    %709 = vmatprep.subr.mxu0 0.0
    %710 = vmatpush1.msra.mxu0 0.0
    %711 = vmatprep.subr.mxu0 0.0
    %712 = vmatpush1.msra.mxu0 0.0
    %713 = vmatprep.subr.mxu0 0.0
    %714 = vmatpush1.msra.mxu0 0.0
    %715 = vmatprep.subr.mxu0 0.0
    %716 = vmatpush1.msra.mxu0 0.0
    %717 = vmatprep.subr.mxu0 0.0
    %718 = vmatpush1.msra.mxu0 0.0
    %719 = vmatprep.subr.mxu0 0.0
    %720 = vmatpush1.msra.mxu0 0.0
    %721 = vmatprep.subr.mxu0 0.0
    %722 = vmatpush1.msra.mxu0 0.0
    %723 = vmatprep.subr.mxu0 0.0
    %724 = vmatpush1.msra.mxu0 0.0
    %725 = vmatprep.subr.mxu0 0.0
    %726 = vmatpush1.msra.mxu0 0.0
    %727 = vmatprep.subr.mxu0 0.0
    %728 = vmatpush1.msra.mxu0 0.0
    %729 = vmatprep.subr.mxu0 0.0
    %730 = vmatpush1.msra.mxu0 0.0
    %731 = vmatprep.mubr.f32.mxu0 0.0
    %732 = vmatmul.mubr.f32.gmra.mrb[0].mxu0 %v620
    %v733 = vpop.f32.mrb[0].mxu0
    %v734 = vadd.f32 %v616, %v733
    %v735 = vpop.f32.mrb[0].mxu0
    %736 = vmatprep.mubr.f32.mxu0 0.0
    %737 = vmatmul.mubr.f32.gmra.mrb[0].mxu0 %v623
    %v738 = vpop.f32.mrb[0].mxu0
    %v739 = vadd.f32 %v616, %v738
    %v740 = vpop.f32.mrb[0].mxu0
    %741 = vmatprep.mubr.f32.mxu0 0.0
    %742 = vmatmul.mubr.f32.gmra.mrb[0].mxu0 %v626
    %v743 = vpop.f32.mrb[0].mxu0
    %v744 = vadd.f32 %v616, %v743
    %v745 = vpop.f32.mrb[0].mxu0
    %746 = vmatprep.mubr.f32.mxu0 0.0
    %747 = vmatmul.mubr.f32.gmra.mrb[0].mxu0 %v629
    %v748 = vpop.f32.mrb[0].mxu0
    %v749 = vadd.f32 %v616, %v748
    %v750 = vpop.f32.mrb[0].mxu0
    %751 = vmatprep.mubr.f32.mxu0 0.0
    %752 = vmatmul.mubr.f32.gmra.mrb[0].mxu0 %v632
    %v753 = vpop.f32.mrb[0].mxu0
    %v754 = vadd.f32 %v616, %v753
    %v755 = vpop.f32.mrb[0].mxu0
    %756 = vmatprep.mubr.f32.mxu0 0.0
    %757 = vmatmul.mubr.f32.gmra.mrb[0].mxu0 %v635
    %v758 = vpop.f32.mrb[0].mxu0
    %v759 = vadd.f32 %v616, %v758
    %v760 = vpop.f32.mrb[0].mxu0
    %761 = vmatprep.mubr.f32.mxu0 0.0
    %762 = vmatmul.mubr.f32.gmra.mrb[0].mxu0 %v638
    %v763 = vpop.f32.mrb[0].mxu0
    %v764 = vadd.f32 %v616, %v763
    %v765 = vpop.f32.mrb[0].mxu0
    %766 = vmatprep.mubr.f32.mxu0 0.0
    %767 = vmatmul.mubr.f32.gmra.mrb[0].mxu0 %v641
    %v768 = vpop.f32.mrb[0].mxu0
    %v769 = vadd.f32 %v616, %v768
    %v770 = vpop.f32.mrb[0].mxu0
    %771 = vmatprep.mubr.f32.mxu0 0.0
    %772 = vmatmul.mubr.f32.gmra.mrb[0].mxu0 %v644
    %v773 = vpop.f32.mrb[0].mxu0
    %v774 = vadd.f32 %v616, %v773
    %v775 = vpop.f32.mrb[0].mxu0
    %776 = vmatprep.mubr.f32.mxu0 0.0
    %777 = vmatmul.mubr.f32.gmra.mrb[0].mxu0 %v647
    %v778 = vpop.f32.mrb[0].mxu0
    %v779 = vadd.f32 %v616, %v778
    %v780 = vpop.f32.mrb[0].mxu0
    %781 = vmatprep.mubr.f32.mxu0 0.0
    %782 = vmatmul.mubr.f32.gmra.mrb[0].mxu0 %v650
    %v783 = vpop.f32.mrb[0].mxu0
    %v784 = vadd.f32 %v616, %v783
    %v785 = vpop.f32.mrb[0].mxu0
    %786 = vmatprep.mubr.f32.mxu0 0.0
    %787 = vmatmul.mubr.f32.gmra.mrb[0].mxu0 %v653
    %v788 = vpop.f32.mrb[0].mxu0
    %v789 = vadd.f32 %v616, %v788
    %v790 = vpop.f32.mrb[0].mxu0
    %791 = vmatprep.mubr.f32.mxu0 0.0
    %792 = vmatmul.mubr.f32.gmra.mrb[0].mxu0 %v656
    %v793 = vpop.f32.mrb[0].mxu0
    %v794 = vadd.f32 %v616, %v793
    %v795 = vpop.f32.mrb[0].mxu0
    %796 = vmatprep.mubr.f32.mxu0 0.0
    %797 = vmatmul.mubr.f32.gmra.mrb[0].mxu0 %v659
    %v798 = vpop.f32.mrb[0].mxu0
    %v799 = vadd.f32 %v616, %v798
    %v800 = vpop.f32.mrb[0].mxu0
    %801 = vmatprep.mubr.f32.mxu0 0.0
    %802 = vmatmul.mubr.f32.gmra.mrb[0].mxu0 %v662
    %v803 = vpop.f32.mrb[0].mxu0
    %v804 = vadd.f32 %v616, %v803
    %v805 = vpop.f32.mrb[0].mxu0
    %806 = vmatprep.mubr.f32.mxu0 0.0
    %807 = vmatmul.mubr.f32.gmra.mrb[0].mxu0 %v665
    %v808 = vpop.f32.mrb[0].mxu0
    %v809 = vadd.f32 %v616, %v808
    %v810 = vpop.f32.mrb[0].mxu0
    %811 = vdwg.mxu0
    %v812 = vmax.f32 %v734, 0.0
    %v813 = vmax.f32 %v739, 0.0
    %v814 = vmax.f32 %v744, 0.0
    %v815 = vmax.f32 %v749, 0.0
    %v816 = vmax.f32 %v754, 0.0
    %v817 = vmax.f32 %v759, 0.0
    %v818 = vmax.f32 %v764, 0.0
    %v819 = vmax.f32 %v769, 0.0
    %v820 = vmax.f32 %v774, 0.0
    %v821 = vmax.f32 %v779, 0.0
    %v822 = vmax.f32 %v784, 0.0
    %v823 = vmax.f32 %v789, 0.0
    %v824 = vmax.f32 %v794, 0.0
    %v825 = vmax.f32 %v799, 0.0
    %v826 = vmax.f32 %v804, 0.0
    %v827 = vmax.f32 %v809, 0.0
    %v828 = vld [vmem:[%s0] sm:$0xff]
    %v829 = vmax.f32 %v828, 1.0
    %v830 = vrcp.pop %v829
    %v831 = vmul.f32 1.0, %v830
    %v832 = vlaneseq
    %v833 = vand.u32 %v832, 127
    %v834 = vmul.u32 %v35, 16
    %v835 = vsub.s32 %v833, %v834
    %vm836 = vcmp.ge.s32.totalorder %v835, 0
    %v837 = vcvt.s32.f32 %v835
    %839 = vset.pattern.permute.xlu0 0
    %840 = vperm.xlu0 %839, %v828
    %v841 = vpop.permute.xlu0 %840
    %vm843 = vcmp.lt.f32.partialorder %v837, %v841
    %vm844 = vmand %vm836, %vm843
    %846 = vset.pattern.permute.xlu0 0
    %847 = vperm.xlu0 %846, %v831
    %v848 = vpop.permute.xlu0 %847
    %v850 = vsel %vm844, %v848, 0.0
    %851 = vmatprep.subr.mxu0 0.0
    %852 = vmatpush1.msra.mxu0 %v812
    %853 = vmatprep.subr.mxu0 0.0
    %854 = vmatpush1.msra.mxu0 %v813
    %855 = vmatprep.subr.mxu0 0.0
    %856 = vmatpush1.msra.mxu0 %v814
    %857 = vmatprep.subr.mxu0 0.0
    %858 = vmatpush1.msra.mxu0 %v815
    %859 = vmatprep.subr.mxu0 0.0
    %860 = vmatpush1.msra.mxu0 %v816
    %861 = vmatprep.subr.mxu0 0.0
    %862 = vmatpush1.msra.mxu0 %v817
    %863 = vmatprep.subr.mxu0 0.0
    %864 = vmatpush1.msra.mxu0 %v818
    %865 = vmatprep.subr.mxu0 0.0
    %866 = vmatpush1.msra.mxu0 %v819
    %867 = vmatprep.subr.mxu0 0.0
    %868 = vmatpush1.msra.mxu0 %v820
    %869 = vmatprep.subr.mxu0 0.0
    %870 = vmatpush1.msra.mxu0 %v821
    %871 = vmatprep.subr.mxu0 0.0
    %872 = vmatpush1.msra.mxu0 %v822
    %873 = vmatprep.subr.mxu0 0.0
    %874 = vmatpush1.msra.mxu0 %v823
    %875 = vmatprep.subr.mxu0 0.0
    %876 = vmatpush1.msra.mxu0 %v824
    %877 = vmatprep.subr.mxu0 0.0
    %878 = vmatpush1.msra.mxu0 %v825
    %879 = vmatprep.subr.mxu0 0.0
    %880 = vmatpush1.msra.mxu0 %v826
    %881 = vmatprep.subr.mxu0 0.0
    %882 = vmatpush1.msra.mxu0 %v827
    %883 = vmatprep.subr.mxu0 0.0
    %884 = vmatpush1.msra.mxu0 0.0
    %885 = vmatprep.subr.mxu0 0.0
    %886 = vmatpush1.msra.mxu0 0.0
    %887 = vmatprep.subr.mxu0 0.0
    %888 = vmatpush1.msra.mxu0 0.0
    %889 = vmatprep.subr.mxu0 0.0
    %890 = vmatpush1.msra.mxu0 0.0
    %891 = vmatprep.subr.mxu0 0.0
    %892 = vmatpush1.msra.mxu0 0.0
    %893 = vmatprep.subr.mxu0 0.0
    %894 = vmatpush1.msra.mxu0 0.0
    %895 = vmatprep.subr.mxu0 0.0
    %896 = vmatpush1.msra.mxu0 0.0
    %897 = vmatprep.subr.mxu0 0.0
    %898 = vmatpush1.msra.mxu0 0.0
    %899 = vmatprep.subr.mxu0 0.0
    %900 = vmatpush1.msra.mxu0 0.0
    %901 = vmatprep.subr.mxu0 0.0
    %902 = vmatpush1.msra.mxu0 0.0
    %903 = vmatprep.subr.mxu0 0.0
    %904 = vmatpush1.msra.mxu0 0.0
    %905 = vmatprep.subr.mxu0 0.0
    %906 = vmatpush1.msra.mxu0 0.0
    %907 = vmatprep.subr.mxu0 0.0
    %908 = vmatpush1.msra.mxu0 0.0
    %909 = vmatprep.subr.mxu0 0.0
    %910 = vmatpush1.msra.mxu0 0.0
    %911 = vmatprep.subr.mxu0 0.0
    %912 = vmatpush1.msra.mxu0 0.0
    %913 = vmatprep.subr.mxu0 0.0
    %914 = vmatpush1.msra.mxu0 0.0
    %915 = vmatprep.mubr.f32.mxu0 0.0
    %916 = vmatmul.mubr.f32.gmra.mrb[0].mxu0 %v850
    %v917 = vpop.f32.mrb[0].mxu0
    %v918 = vadd.f32 0.0, %v917
    %v919 = vpop.f32.mrb[0].mxu0
    %920 = vdwg.mxu0
    %921 = vmatprep.subr.mxu0 0.0
    %922 = vmatpush1.xpose.msra.mxu0 %v918
    %923 = vmatprep.subr.mxu0 0.0
    %924 = vmatpush1.xpose.msra.mxu0 0.0
    %925 = vmatprep.subr.mxu0 0.0
    %926 = vmatpush1.xpose.msra.mxu0 0.0
    %927 = vmatprep.subr.mxu0 0.0
    %928 = vmatpush1.xpose.msra.mxu0 0.0
    %929 = vmatprep.subr.mxu0 0.0
    %930 = vmatpush1.xpose.msra.mxu0 0.0
    %931 = vmatprep.subr.mxu0 0.0
    %932 = vmatpush1.xpose.msra.mxu0 0.0
    %933 = vmatprep.subr.mxu0 0.0
    %934 = vmatpush1.xpose.msra.mxu0 0.0
    %935 = vmatprep.subr.mxu0 0.0
    %936 = vmatpush1.xpose.msra.mxu0 0.0
    %937 = vmatprep.subr.mxu0 0.0
    %938 = vmatpush1.xpose.msra.mxu0 0.0
    %939 = vmatprep.subr.mxu0 0.0
    %940 = vmatpush1.xpose.msra.mxu0 0.0
    %941 = vmatprep.subr.mxu0 0.0
    %942 = vmatpush1.xpose.msra.mxu0 0.0
    %943 = vmatprep.subr.mxu0 0.0
    %944 = vmatpush1.xpose.msra.mxu0 0.0
    %945 = vmatprep.subr.mxu0 0.0
    %946 = vmatpush1.xpose.msra.mxu0 0.0
    %947 = vmatprep.subr.mxu0 0.0
    %948 = vmatpush1.xpose.msra.mxu0 0.0
    %949 = vmatprep.subr.mxu0 0.0
    %950 = vmatpush1.xpose.msra.mxu0 0.0
    %951 = vmatprep.subr.mxu0 0.0
    %952 = vmatpush1.xpose.msra.mxu0 0.0
    %953 = vmatprep.subr.mxu0 0.0
    %954 = vmatpush1.xpose.msra.mxu0 0.0
    %955 = vmatprep.subr.mxu0 0.0
    %956 = vmatpush1.xpose.msra.mxu0 0.0
    %957 = vmatprep.subr.mxu0 0.0
    %958 = vmatpush1.xpose.msra.mxu0 0.0
    %959 = vmatprep.subr.mxu0 0.0
    %960 = vmatpush1.xpose.msra.mxu0 0.0
    %961 = vmatprep.subr.mxu0 0.0
    %962 = vmatpush1.xpose.msra.mxu0 0.0
    %963 = vmatprep.subr.mxu0 0.0
    %964 = vmatpush1.xpose.msra.mxu0 0.0
    %965 = vmatprep.subr.mxu0 0.0
    %966 = vmatpush1.xpose.msra.mxu0 0.0
    %967 = vmatprep.subr.mxu0 0.0
    %968 = vmatpush1.xpose.msra.mxu0 0.0
    %969 = vmatprep.subr.mxu0 0.0
    %970 = vmatpush1.xpose.msra.mxu0 0.0
    %971 = vmatprep.subr.mxu0 0.0
    %972 = vmatpush1.xpose.msra.mxu0 0.0
    %973 = vmatprep.subr.mxu0 0.0
    %974 = vmatpush1.xpose.msra.mxu0 0.0
    %975 = vmatprep.subr.mxu0 0.0
    %976 = vmatpush1.xpose.msra.mxu0 0.0
    %977 = vmatprep.subr.mxu0 0.0
    %978 = vmatpush1.xpose.msra.mxu0 0.0
    %979 = vmatprep.subr.mxu0 0.0
    %980 = vmatpush1.xpose.msra.mxu0 0.0
    %981 = vmatprep.subr.mxu0 0.0
    %982 = vmatpush1.xpose.msra.mxu0 0.0
    %983 = vmatprep.subr.mxu0 0.0
    %984 = vmatpush1.xpose.msra.mxu0 0.0
    %985 = vmatprep.mubr.f32.mxu0 0.0
    %986 = vmatmul.mubr.f32.gmra.mrb[0].mxu0 %v918
    %v987 = vpop.f32.mrb[0].mxu0
    %v988 = vadd.f32 0.0, %v987
    %v989 = vpop.f32.mrb[0].mxu0
    %990 = vdwg.mxu0
    %v991 = vmul.f32 %v918, %v918
    %992 = vadd.xlane.f32.xlu0 %v991
    %v993 = vpop.xlane.xlu0 %992
    %994 = vxpose.xlu0.b32.start [1/16] %v993, 128
    %995 = vxpose.xlu0.b32.cont [2/16] 0.0, 128
    %996 = vxpose.xlu0.b32.cont [3/16] 0.0, 128
    %997 = vxpose.xlu0.b32.cont [4/16] 0.0, 128
    %998 = vxpose.xlu0.b32.cont [5/16] 0.0, 128
    %999 = vxpose.xlu0.b32.cont [6/16] 0.0, 128
    %1000 = vxpose.xlu0.b32.cont [7/16] 0.0, 128
    %1001 = vxpose.xlu0.b32.cont [8/16] 0.0, 128
    %1002 = vxpose.xlu0.b32.cont [9/16] 0.0, 128
    %1003 = vxpose.xlu0.b32.cont [10/16] 0.0, 128
    %1004 = vxpose.xlu0.b32.cont [11/16] 0.0, 128
    %1005 = vxpose.xlu0.b32.cont [12/16] 0.0, 128
    %1006 = vxpose.xlu0.b32.cont [13/16] 0.0, 128
    %1007 = vxpose.xlu0.b32.cont [14/16] 0.0, 128
    %1008 = vxpose.xlu0.b32.cont [15/16] 0.0, 128
    %1009 = vxpose.xlu0.b32.end [16/16] 0.0, 128
    %v1010 = vpop.trf.xlu0
    %v1011 = vpop.trf.xlu0
    %v1012 = vpop.trf.xlu0
    %v1013 = vpop.trf.xlu0
    %v1014 = vpop.trf.xlu0
    %v1015 = vpop.trf.xlu0
    %v1016 = vpop.trf.xlu0
    %v1017 = vpop.trf.xlu0
    %v1018 = vpop.trf.xlu0
    %v1019 = vpop.trf.xlu0
    %v1020 = vpop.trf.xlu0
    %v1021 = vpop.trf.xlu0
    %v1022 = vpop.trf.xlu0
    %v1023 = vpop.trf.xlu0
    %v1024 = vpop.trf.xlu0
    %v1025 = vpop.trf.xlu0
    %v1026 = vlaneseq
    %v1027 = vshrl.u32 %v1026, 7
    %v1028 = vsub.s32 0, %v1027
    %v1029 = vrot.slane %v1010, %v1028
    %v1030 = vadd.f32 %v993, %v1029
    %v1031 = vmul.f32 %v988, 2.0
    %v1032 = vsub.f32 %v1030, %v1031
    %v1033 = vmax.f32 %v1032, 0.0
    %vm1034 = vcmp.eq.s32.totalorder %v35, %v833
    %v1035 = vsel %vm1034, 0.0, %v1033
    %v1036 = vrsqrt.pop %v1035
    %v1037 = vmul.f32 %v1035, %v1036
    %vm1038 = vcmp.eq.f32.partialorder %v1035, inf
    %v1039 = vsel %vm1038, %v1035, %v1037
    %vm1040 = vcmp.eq.f32.partialorder %v1035, 0.0
    %v1041 = vand.u32 %v1035, 2147483648
    %v1042 = vsel %vm1040, %v1041, %v1039
    %vm1043 = vcmask 64512
    %1044 = vst.msk [vmem:[#allocation2] sm:$0xff] %vm1043, %v1042
    // Predicated region
    $region18: #{tpu_custom_call.1} parent=1 // pred_check
      _
    $region19: #{tpu_custom_call.1} parent=1 // pred_check_branch
      %1046 = sbr.rel (0) target = $region21
    $region20: #{tpu_custom_call.1} parent=1 // pred_region
      %s1048 = ssub.s32 128, 128
      %1049 = vsyncadd [#allocation3], %s1048
      %s1051 = sshll.u32 [#allocation2], 4
      %s1052 = int_to_ptr.vmem [resolvable:$true] %s1051
      %1054 = dma.vmem_to_hbm [thread:$0]  %s1052, 128, %s4, [#allocation3]
    $region21: #{tpu_custom_call.1} parent=1 // pred_fallthru
      _
    // Predicated region
    $region22: #{tpu_custom_call.1} parent=1 // pred_check
      _
    $region23: #{tpu_custom_call.1} parent=1 // pred_check_branch
      %1056 = sbr.rel (0) target = $region25
    $region24: #{tpu_custom_call.1} parent=1 // pred_region
      %1057 = dma.done [#allocation3], 128
    $region25: #{tpu_custom_call.1} parent=1 // pred_fallthru
      _
    %1058 = vsyncpa [#allocation3], 1

</llo_original>
